<compile_context>
chip_gen: v5e
topology: v5e:2x2
jax: 0.10.0
libtpu: 0.0.40
codegen_flags: <defaults>
</compile_context>

<pallas_src>
import jax
import jax.numpy as jnp
from jax.experimental import pallas as pl
from jax.experimental.pallas import tpu as pltpu

GAMMA = 2       # integer gamma=2 -> plain squares (no jnp.power / extra EUP ops)
ALPHA = 0.25    # BCEFocalLoss default alpha
SMOOTH = 1e-5   # dice smoothing


def _fd_partial_kernel(out_ref, lab_ref, sums_ref,
                       acc_focal, acc_inter, acc_lab, acc_out):
    """Accumulate focal-loss and dice partial sums over the (batch, hw) grid.

    out_ref/lab_ref: (1, C, HW_TILE) VMEM tiles (probabilities / targets).
    sums_ref: (4,) SMEM output, written once at the final grid step:
        [sum(focal), sum(t0*p0), sum(t0), sum(p0)]   (channel 0 for dice)
    acc_*: VMEM f32 vector accumulators persisting across grid steps.
    """
    b = pl.program_id(0)
    h = pl.program_id(1)
    nb = pl.num_programs(0)
    nh = pl.num_programs(1)

    @pl.when(jnp.logical_and(b == 0, h == 0))
    def _init():
        acc_focal[...] = jnp.zeros_like(acc_focal)
        acc_inter[...] = jnp.zeros_like(acc_inter)
        acc_lab[...] = jnp.zeros_like(acc_lab)
        acc_out[...] = jnp.zeros_like(acc_out)

    p = out_ref[0].astype(jnp.float32)   # (C, HW_TILE) predicted probabilities
    t = lab_ref[0].astype(jnp.float32)   # (C, HW_TILE) targets

    one_m_p = 1.0 - p
    log_p = jnp.log(p)          # only EUP traffic in the kernel
    log_1mp = jnp.log(one_m_p)
    # -alpha*(1-p)^2 * t * log(p) - (1-alpha)*p^2 * (1-t) * log(1-p)
    focal = (-ALPHA * one_m_p * one_m_p * t * log_p
             - (1.0 - ALPHA) * p * p * (1.0 - t) * log_1mp)

    # Elementwise VPU accumulation only; no cross-lane reduce per step.
    acc_focal[...] += focal

    # Dice uses only channel 0 (static first-row slice, stays lane-dense).
    p0 = p[0:1, :]      # (1, HW_TILE)
    t0 = t[0:1, :]      # (1, HW_TILE)
    acc_inter[...] += t0 * p0
    acc_lab[...] += t0
    acc_out[...] += p0

    @pl.when(jnp.logical_and(b == nb - 1, h == nh - 1))
    def _finalize():
        # Single cross-lane reduction per accumulator, paid once per call.
        sums_ref[0] = jnp.sum(acc_focal[...])
        sums_ref[1] = jnp.sum(acc_inter[...])
        sums_ref[2] = jnp.sum(acc_lab[...])
        sums_ref[3] = jnp.sum(acc_out[...])


def _pick_hw_tile(hw, c, itemsize, target_bytes=2 << 20):
    """Largest spatial tile that divides hw exactly, preferring multiples of 128
    (lane-dense), with per-input block bytes (c * tile * itemsize) near target."""
    target_elems = max(128, target_bytes // max(1, c * itemsize))
    if hw <= target_elems:
        return hw                      # whole spatial extent fits in one block
    if hw % 128 == 0:
        kmax = min(target_elems // 128, hw // 128)
        for k in range(kmax, 0, -1):
            if hw % (128 * k) == 0:
                return 128 * k         # lane-dense divisor
    # Fallback: largest divisor of hw <= target (exact tiling, no padding/masking).
    for tsize in range(min(target_elems, hw), 0, -1):
        if hw % tsize == 0:
            return tsize
    return hw


def fd_loss(outputs, labels):
    """Pallas implementation of FDLoss.forward(outputs, labels) (NCHW inputs)."""
    B, C, H, W = outputs.shape
    HW = H * W
    itemsize = jnp.dtype(outputs.dtype).itemsize
    tile = _pick_hw_tile(HW, C, itemsize)
    n_hw = HW // tile

    # Lane-dense layout: (B, C, H*W); contiguous reshape, free in XLA.
    out3 = outputs.reshape(B, C, HW)
    lab3 = labels.reshape(B, C, HW)

    n_elems = B * C * HW
    cost = pl.CostEstimate(
        flops=12 * n_elems,
        transcendentals=2 * n_elems,
        bytes_accessed=(jnp.dtype(outputs.dtype).itemsize
                        + jnp.dtype(labels.dtype).itemsize) * n_elems,
    )

    sums = pl.pallas_call(
        _fd_partial_kernel,
        out_shape=jax.ShapeDtypeStruct((4,), jnp.float32),
        grid_spec=pltpu.PrefetchScalarGridSpec(
            num_scalar_prefetch=0,
            grid=(B, n_hw),
            in_specs=[
                pl.BlockSpec((1, C, tile), lambda b, h: (b, 0, h)),
                pl.BlockSpec((1, C, tile), lambda b, h: (b, 0, h)),
            ],
            out_specs=pl.BlockSpec(memory_space=pltpu.MemorySpace.SMEM),
            scratch_shapes=[
                pltpu.VMEM((C, tile), jnp.float32),   # focal accumulator
                pltpu.VMEM((1, tile), jnp.float32),   # sum(t0*p0)
                pltpu.VMEM((1, tile), jnp.float32),   # sum(t0)
                pltpu.VMEM((1, tile), jnp.float32),   # sum(p0)
            ],
        ),
        compiler_params=pltpu.CompilerParams(
            # Shared resident accumulators across the whole grid -> both axes
            # must be "arbitrary" (see TODO in header about v7x parallelism).
            dimension_semantics=("arbitrary", "arbitrary")),
        cost_estimate=cost,
    )(out3, lab3)

    focal_sum = sums[0]
    inter = sums[1]
    lab_sum = sums[2]
    out_sum = sums[3]

    focal_mean = focal_sum / jnp.float32(n_elems)       # reduction='elementwise_mean'
    dice = (2.0 * inter + SMOOTH) / (lab_sum + out_sum + SMOOTH)
    return focal_mean + (1.0 - dice)


def _fd_loss_ref(outputs, labels):
    """Pure-JAX reference matching the PyTorch module exactly."""
    p = outputs.astype(jnp.float32)
    t = labels.astype(jnp.float32)
    focal = (-ALPHA * (1.0 - p) ** 2 * t * jnp.log(p)
             - (1.0 - ALPHA) * p ** 2 * (1.0 - t) * jnp.log(1.0 - p))
    focal_mean = jnp.mean(focal)
    p0 = p[:, 0, :, :]
    t0 = t[:, 0, :, :]
    inter = jnp.sum(t0 * p0)
    dice = (2.0 * inter + SMOOTH) / (jnp.sum(t0) + jnp.sum(p0) + SMOOTH)
    return focal_mean + (1.0 - dice)


if __name__ == "__main__":
    key = jax.random.PRNGKey(0)
    k1, k2 = jax.random.split(key)

    B, C, H, W = 2, 4, 16, 16
    # FDLoss has no parameters; inputs are probabilities (must be in (0,1) for log).
    logits = jax.random.normal(k1, (B, C, H, W), dtype=jnp.float32)
    outputs = jax.nn.sigmoid(logits)
    labels = jax.random.bernoulli(k2, 0.5, (B, C, H, W)).astype(jnp.float32)

    loss = jax.jit(fd_loss)(outputs, labels)
    jax.block_until_ready(loss)

    ref = _fd_loss_ref(outputs, labels)
    assert jnp.allclose(loss, ref, rtol=1e-5, atol=1e-5), (loss, ref)

    print("KERNEL_OK")
</pallas_src>

<mosaic_0001>
module attributes {stable_mosaic.version = 11 : i64} {
  func.func @_fd_partial_kernel(%arg0: i32, %arg1: i32, %arg2: memref<1x4x256xf32, #tpu.memory_space<vmem>>, %arg3: memref<1x4x256xf32, #tpu.memory_space<vmem>>, %arg4: memref<4xf32, #tpu.memory_space<smem>>, %arg5: memref<4x256xf32, #tpu.memory_space<vmem>>, %arg6: memref<1x256xf32, #tpu.memory_space<vmem>>, %arg7: memref<1x256xf32, #tpu.memory_space<vmem>>, %arg8: memref<1x256xf32, #tpu.memory_space<vmem>>) attributes {dimension_semantics = [#tpu.dimension_semantics<arbitrary>, #tpu.dimension_semantics<arbitrary>], iteration_bounds = array<i64: 2, 1>, scalar_prefetch = 0 : i64, scratch_operands = 4 : i64, tpu.core_type = #tpu.core_type<tc>, window_params = [{transform_indices = @transform_0, window_bounds = array<i64: 1, 4, 256>}, {transform_indices = @transform_1, window_bounds = array<i64: 1, 4, 256>}, {transform_indices = @transform_2, window_bounds = array<i64: 4>}]} {
    %c0_i32 = arith.constant 0 : i32
    %0 = arith.cmpi eq, %arg0, %c0_i32 : i32
    %c0_i32_0 = arith.constant 0 : i32
    %1 = arith.cmpi eq, %arg1, %c0_i32_0 : i32
    %2 = arith.andi %0, %1 : i1
    %3 = arith.extui %2 : i1 to i32
    %c0_i32_1 = arith.constant 0 : i32
    %4 = arith.cmpi ne, %3, %c0_i32_1 : i32
    scf.if %4 {
      %cst_28 = arith.constant 0.000000e+00 : f32
      %46 = vector.broadcast %cst_28 : f32 to vector<4x256xf32>
      %c0_29 = arith.constant 0 : index
      %c0_30 = arith.constant 0 : index
      %47 = vector.load %arg5[%c0_29, %c0_30] : memref<4x256xf32, #tpu.memory_space<vmem>>, vector<4x256xf32>
      tpu.vector_store %arg5[%c0_29, %c0_30], %46 {strides = array<i32>} : memref<4x256xf32, #tpu.memory_space<vmem>>, vector<4x256xf32>,
      %cst_31 = arith.constant 0.000000e+00 : f32
      %48 = vector.broadcast %cst_31 : f32 to vector<1x256xf32>
      %c0_32 = arith.constant 0 : index
      %c0_33 = arith.constant 0 : index
      %49 = vector.load %arg6[%c0_32, %c0_33] : memref<1x256xf32, #tpu.memory_space<vmem>>, vector<1x256xf32>
      tpu.vector_store %arg6[%c0_32, %c0_33], %48 {strides = array<i32>} : memref<1x256xf32, #tpu.memory_space<vmem>>, vector<1x256xf32>,
      %cst_34 = arith.constant 0.000000e+00 : f32
      %50 = vector.broadcast %cst_34 : f32 to vector<1x256xf32>
      %c0_35 = arith.constant 0 : index
      %c0_36 = arith.constant 0 : index
      %51 = vector.load %arg7[%c0_35, %c0_36] : memref<1x256xf32, #tpu.memory_space<vmem>>, vector<1x256xf32>
      tpu.vector_store %arg7[%c0_35, %c0_36], %50 {strides = array<i32>} : memref<1x256xf32, #tpu.memory_space<vmem>>, vector<1x256xf32>,
      %cst_37 = arith.constant 0.000000e+00 : f32
      %52 = vector.broadcast %cst_37 : f32 to vector<1x256xf32>
      %c0_38 = arith.constant 0 : index
      %c0_39 = arith.constant 0 : index
      %53 = vector.load %arg8[%c0_38, %c0_39] : memref<1x256xf32, #tpu.memory_space<vmem>>, vector<1x256xf32>
      tpu.vector_store %arg8[%c0_38, %c0_39], %52 {strides = array<i32>} : memref<1x256xf32, #tpu.memory_space<vmem>>, vector<1x256xf32>,
    } else {
    }
    %c0 = arith.constant 0 : index
    %c0_2 = arith.constant 0 : index
    %c0_3 = arith.constant 0 : index
    %5 = vector.load %arg2[%c0, %c0_2, %c0_3] : memref<1x4x256xf32, #tpu.memory_space<vmem>>, vector<1x4x256xf32>
    %6 = vector.shape_cast %5 : vector<1x4x256xf32> to vector<4x256xf32>
    %c0_4 = arith.constant 0 : index
    %c0_5 = arith.constant 0 : index
    %c0_6 = arith.constant 0 : index
    %7 = vector.load %arg3[%c0_4, %c0_5, %c0_6] : memref<1x4x256xf32, #tpu.memory_space<vmem>>, vector<1x4x256xf32>
    %8 = vector.shape_cast %7 : vector<1x4x256xf32> to vector<4x256xf32>
    %cst = arith.constant 1.000000e+00 : f32
    %9 = vector.broadcast %cst : f32 to vector<4x256xf32>
    %10 = arith.subf %9, %6 : vector<4x256xf32>
    %11 = math.log %6 : vector<4x256xf32>
    %12 = math.log %10 : vector<4x256xf32>
    %cst_7 = arith.constant -2.500000e-01 : f32
    %13 = vector.broadcast %cst_7 : f32 to vector<4x256xf32>
    %14 = arith.mulf %13, %10 : vector<4x256xf32>
    %15 = arith.mulf %14, %10 : vector<4x256xf32>
    %16 = arith.mulf %15, %8 : vector<4x256xf32>
    %17 = arith.mulf %16, %11 : vector<4x256xf32>
    %cst_8 = arith.constant 7.500000e-01 : f32
    %18 = vector.broadcast %cst_8 : f32 to vector<4x256xf32>
    %19 = arith.mulf %18, %6 : vector<4x256xf32>
    %20 = arith.mulf %19, %6 : vector<4x256xf32>
    %cst_9 = arith.constant 1.000000e+00 : f32
    %21 = vector.broadcast %cst_9 : f32 to vector<4x256xf32>
    %22 = arith.subf %21, %8 : vector<4x256xf32>
    %23 = arith.mulf %20, %22 : vector<4x256xf32>
    %24 = arith.mulf %23, %12 : vector<4x256xf32>
    %25 = arith.subf %17, %24 : vector<4x256xf32>
    %c0_10 = arith.constant 0 : index
    %c0_11 = arith.constant 0 : index
    %26 = vector.load %arg5[%c0_10, %c0_11] : memref<4x256xf32, #tpu.memory_space<vmem>>, vector<4x256xf32>
    %27 = arith.addf %26, %25 : vector<4x256xf32>
    %c0_12 = arith.constant 0 : index
    %c0_13 = arith.constant 0 : index
    %28 = vector.load %arg5[%c0_12, %c0_13] : memref<4x256xf32, #tpu.memory_space<vmem>>, vector<4x256xf32>
    tpu.vector_store %arg5[%c0_12, %c0_13], %27 {strides = array<i32>} : memref<4x256xf32, #tpu.memory_space<vmem>>, vector<4x256xf32>,
    %29 = vector.extract_strided_slice %6 {offsets = [0, 0], sizes = [1, 256], strides = [1, 1]} : vector<4x256xf32> to vector<1x256xf32>
    %30 = vector.extract_strided_slice %8 {offsets = [0, 0], sizes = [1, 256], strides = [1, 1]} : vector<4x256xf32> to vector<1x256xf32>
    %c0_14 = arith.constant 0 : index
    %c0_15 = arith.constant 0 : index
    %31 = vector.load %arg6[%c0_14, %c0_15] : memref<1x256xf32, #tpu.memory_space<vmem>>, vector<1x256xf32>
    %32 = arith.mulf %30, %29 : vector<1x256xf32>
    %33 = arith.addf %31, %32 : vector<1x256xf32>
    %c0_16 = arith.constant 0 : index
    %c0_17 = arith.constant 0 : index
    %34 = vector.load %arg6[%c0_16, %c0_17] : memref<1x256xf32, #tpu.memory_space<vmem>>, vector<1x256xf32>
    tpu.vector_store %arg6[%c0_16, %c0_17], %33 {strides = array<i32>} : memref<1x256xf32, #tpu.memory_space<vmem>>, vector<1x256xf32>,
    %c0_18 = arith.constant 0 : index
    %c0_19 = arith.constant 0 : index
    %35 = vector.load %arg7[%c0_18, %c0_19] : memref<1x256xf32, #tpu.memory_space<vmem>>, vector<1x256xf32>
    %36 = arith.addf %35, %30 : vector<1x256xf32>
    %c0_20 = arith.constant 0 : index
    %c0_21 = arith.constant 0 : index
    %37 = vector.load %arg7[%c0_20, %c0_21] : memref<1x256xf32, #tpu.memory_space<vmem>>, vector<1x256xf32>
    tpu.vector_store %arg7[%c0_20, %c0_21], %36 {strides = array<i32>} : memref<1x256xf32, #tpu.memory_space<vmem>>, vector<1x256xf32>,
    %c0_22 = arith.constant 0 : index
    %c0_23 = arith.constant 0 : index
    %38 = vector.load %arg8[%c0_22, %c0_23] : memref<1x256xf32, #tpu.memory_space<vmem>>, vector<1x256xf32>
    %39 = arith.addf %38, %29 : vector<1x256xf32>
    %c0_24 = arith.constant 0 : index
    %c0_25 = arith.constant 0 : index
    %40 = vector.load %arg8[%c0_24, %c0_25] : memref<1x256xf32, #tpu.memory_space<vmem>>, vector<1x256xf32>
    tpu.vector_store %arg8[%c0_24, %c0_25], %39 {strides = array<i32>} : memref<1x256xf32, #tpu.memory_space<vmem>>, vector<1x256xf32>,
    %c1_i32 = arith.constant 1 : i32
    %41 = arith.cmpi eq, %arg0, %c1_i32 : i32
    %c0_i32_26 = arith.constant 0 : i32
    %42 = arith.cmpi eq, %arg1, %c0_i32_26 : i32
    %43 = arith.andi %41, %42 : i1
    %44 = arith.extui %43 : i1 to i32
    %c0_i32_27 = arith.constant 0 : i32
    %45 = arith.cmpi ne, %44, %c0_i32_27 : i32
    scf.if %45 {
      %c0_28 = arith.constant 0 : index
      %c0_29 = arith.constant 0 : index
      %46 = vector.load %arg5[%c0_28, %c0_29] : memref<4x256xf32, #tpu.memory_space<vmem>>, vector<4x256xf32>
      %47 = vector.shape_cast %46 : vector<4x256xf32> to vector<1x4x256xf32>
      %cst_30 = arith.constant dense<0.000000e+00> : vector<1xf32>
      %48 = vector.multi_reduction <add>, %47, %cst_30 [1, 2] : vector<1x4x256xf32> to vector<1xf32>
      %49 = vector.shape_cast %48 : vector<1xf32> to vector<1x1x1xf32>
      %50 = vector.extract %49[0, 0, 0] : f32 from vector<1x1x1xf32>
      %c0_31 = arith.constant 0 : index
      %51 = memref.load %arg4[%c0_31] : memref<4xf32, #tpu.memory_space<smem>>
      memref.store %50, %arg4[%c0_31] : memref<4xf32, #tpu.memory_space<smem>>
      %c0_32 = arith.constant 0 : index
      %c0_33 = arith.constant 0 : index
      %52 = vector.load %arg6[%c0_32, %c0_33] : memref<1x256xf32, #tpu.memory_space<vmem>>, vector<1x256xf32>
      %53 = vector.shape_cast %52 : vector<1x256xf32> to vector<1x1x256xf32>
      %cst_34 = arith.constant dense<0.000000e+00> : vector<1xf32>
      %54 = vector.multi_reduction <add>, %53, %cst_34 [1, 2] : vector<1x1x256xf32> to vector<1xf32>
      %55 = vector.shape_cast %54 : vector<1xf32> to vector<1x1x1xf32>
      %56 = vector.extract %55[0, 0, 0] : f32 from vector<1x1x1xf32>
      %c1 = arith.constant 1 : index
      %57 = memref.load %arg4[%c1] : memref<4xf32, #tpu.memory_space<smem>>
      memref.store %56, %arg4[%c1] : memref<4xf32, #tpu.memory_space<smem>>
      %c0_35 = arith.constant 0 : index
      %c0_36 = arith.constant 0 : index
      %58 = vector.load %arg7[%c0_35, %c0_36] : memref<1x256xf32, #tpu.memory_space<vmem>>, vector<1x256xf32>
      %59 = vector.shape_cast %58 : vector<1x256xf32> to vector<1x1x256xf32>
      %cst_37 = arith.constant dense<0.000000e+00> : vector<1xf32>
      %60 = vector.multi_reduction <add>, %59, %cst_37 [1, 2] : vector<1x1x256xf32> to vector<1xf32>
      %61 = vector.shape_cast %60 : vector<1xf32> to vector<1x1x1xf32>
      %62 = vector.extract %61[0, 0, 0] : f32 from vector<1x1x1xf32>
      %c2 = arith.constant 2 : index
      %63 = memref.load %arg4[%c2] : memref<4xf32, #tpu.memory_space<smem>>
      memref.store %62, %arg4[%c2] : memref<4xf32, #tpu.memory_space<smem>>
      %c0_38 = arith.constant 0 : index
      %c0_39 = arith.constant 0 : index
      %64 = vector.load %arg8[%c0_38, %c0_39] : memref<1x256xf32, #tpu.memory_space<vmem>>, vector<1x256xf32>
      %65 = vector.shape_cast %64 : vector<1x256xf32> to vector<1x1x256xf32>
      %cst_40 = arith.constant dense<0.000000e+00> : vector<1xf32>
      %66 = vector.multi_reduction <add>, %65, %cst_40 [1, 2] : vector<1x1x256xf32> to vector<1xf32>
      %67 = vector.shape_cast %66 : vector<1xf32> to vector<1x1x1xf32>
      %68 = vector.extract %67[0, 0, 0] : f32 from vector<1x1x1xf32>
      %c3 = arith.constant 3 : index
      %69 = memref.load %arg4[%c3] : memref<4xf32, #tpu.memory_space<smem>>
      memref.store %68, %arg4[%c3] : memref<4xf32, #tpu.memory_space<smem>>
    } else {
    }
    return
  }
  func.func @transform_0(%arg0: i32, %arg1: i32) -> (i32, i32, i32) {
    %c0_i32 = arith.constant 0 : i32
    %c0_i32_0 = arith.constant 0 : i32
    return %arg0, %c0_i32, %arg1 : i32, i32, i32
  }
  func.func @transform_1(%arg0: i32, %arg1: i32) -> (i32, i32, i32) {
    %c0_i32 = arith.constant 0 : i32
    %c0_i32_0 = arith.constant 0 : i32
    return %arg0, %c0_i32, %arg1 : i32, i32, i32
  }
  func.func @transform_2(%arg0: i32, %arg1: i32) -> i32 {
    %c0_i32 = arith.constant 0 : i32
    %c0_i32_0 = arith.constant 0 : i32
    return %c0_i32 : i32
  }
}

</mosaic_0001>

<llo_original>
// kernel: fd_loss.1
$region0: #{fd_loss.1}
  #allocation0 [shape = 'u32[]', space=smem, size = 0x4, offset = 0x4, fixed_abs, tag = 'smem constant byte address 0x4 - core index']
  #allocation1 [shape = 'u32[72,128]{1,0:T(1,128)}', space=vmem, size = 0x9000, scoped, tag = 'internal scratch']
  #allocation2 [shape = 'f32[4,256]{1,0:T(4,128)}', space=vmem, size = 0x1000, scoped, tag = 'scratch operand']
  #allocation3 [shape = 'f32[1,256]{1,0:T(1,128)}', space=vmem, size = 0x400, scoped, tag = 'scratch operand']
  #allocation4 [shape = 'f32[1,256]{1,0:T(1,128)}', space=vmem, size = 0x400, scoped, tag = 'scratch operand']
  #allocation5 [shape = 'f32[1,256]{1,0:T(1,128)}', space=vmem, size = 0x400, scoped, tag = 'scratch operand']
  %s0 = inlined_call_operand.vmem [shape: f32[2,4,256], index: 0, kind: input, shape index: {}]
  %s1 = inlined_call_operand.vmem [shape: f32[2,4,256], index: 1, kind: input, shape index: {}]
  %s2 = inlined_call_operand.vmem [shape: f32[4], index: 2, kind: output, shape index: {}]
  %s3 = sld [smem:[#allocation0]]
  $region49: #{fd_loss.1} parent=0
    _
  %s5 = ssub.s32 1, %s3
  %s6 = scalar_select 0, %s5, %s3
  $region1: #{fd_loss.1} parent=0
    #allocation6 [shape = 'u8[512]{0}', space=smem, size = 0x200, scoped, tag = 'output window, operand 0, single buffered']
    #allocation7 [shape = 's32[2]{0}', space=sflag, size = 0x8, scoped, tag = 'scoped memory for fd_loss.1']
    %7 = vsyncpa [#allocation7], 0
    loop: start=0, step=1, limit=4
    $region2: #{fd_loss.1} parent=1 // loop_pre_header
      _
    $region3: #{fd_loss.1} parent=1 // loop_header
      %s9 = sphi 0, %s13
      %p10 = scmp.ge.s32.totalorder %s9, 4
      %s16 = sphi 0, %s28
      %s17 = sphi 0, %s24
      %s18 = sphi 0, %s16
      %s19 = sphi 0, %s17
      %s20 = sphi 0, %s18
      %s21 = sphi 0, %s19
      %s33 = sphi 0, %s35
      %s36 = sphi 0, %s33
      %s37 = sphi 0, %s36
      %s53 = sphi 0, %s37
      %s61 = sphi 0, %s63
      %s64 = sphi 0, %s61
      %s65 = sphi 0, %s64
      %s81 = sphi 0, %s65
      %s85 = sphi 0, %s85
      %s87 = sphi 0, %s85
      %s88 = sphi 0, %s87
      %s102 = sphi 0, %s88
    $region4: #{fd_loss.1} parent=1 // loop_header_branch
      %12 = sbr.rel (%p10) target = $region8
    $region5: #{fd_loss.1} parent=1 // loop_body
      %s14 = ssub.s32 %s9, 1
      %s15 = ssub.s32 %s9, 2
      %s22 = sadd.s32 1, %s17
      %p23 = scmp.ge.s32.totalorder %s22, 1
      %s24 = scalar_select %p23, 0, %s22
      %s25 = sadd.s32 1, %s16
      %s26 = scalar_select %p23, %s25, %s16
      %p27 = scmp.ge.s32.totalorder %s26, 2
      %s28 = scalar_select %p27, 0, %s26
      %s29 = ssub.s32 %s16, %s28
      %s30 = ssub.s32 %s17, %s24
      %s31 = sor.u32 %s29, %s30
      %p32 = scmp.eq.s32.totalorder %s31, 0
      %s34 = sadd.s32 %s33, 1
      %s35 = scalar_select %p32, %s33, %s34
      %p38 = pneg %p32
      %p39 = scmp.eq.s32.totalorder %s9, 1
      %p40 = por %p38, %p39
      %p41 = scmp.ne.s32.totalorder %s33, %s36
      %p42 = scmp.eq.s32.totalorder %s9, 0
      %p43 = por %p41, %p42
      %p44 = scmp.ne.s32.totalorder %s33, %s36
      %p45 = scmp.eq.s32.totalorder %s14, 1
      %p46 = por %p44, %p45
      %p47 = scmp.ne.s32.totalorder %s36, %s37
      %p48 = scmp.eq.s32.totalorder %s14, 0
      %p49 = por %p47, %p48
      %p50 = scmp.ne.s32.totalorder %s36, %s37
      %p51 = scmp.eq.s32.totalorder %s15, 1
      %p52 = por %p50, %p51
      %p54 = scmp.ne.s32.totalorder %s37, %s53
      %p55 = scmp.eq.s32.totalorder %s15, 0
      %p56 = por %p54, %p55
      %s57 = ssub.s32 %s16, %s28
      %s58 = ssub.s32 %s17, %s24
      %s59 = sor.u32 %s57, %s58
      %p60 = scmp.eq.s32.totalorder %s59, 0
      %s62 = sadd.s32 %s61, 1
      %s63 = scalar_select %p60, %s61, %s62
      %p66 = pneg %p60
      %p67 = scmp.eq.s32.totalorder %s9, 1
      %p68 = por %p66, %p67
      %p69 = scmp.ne.s32.totalorder %s61, %s64
      %p70 = scmp.eq.s32.totalorder %s9, 0
      %p71 = por %p69, %p70
      %p72 = scmp.ne.s32.totalorder %s61, %s64
      %p73 = scmp.eq.s32.totalorder %s14, 1
      %p74 = por %p72, %p73
      %p75 = scmp.ne.s32.totalorder %s64, %s65
      %p76 = scmp.eq.s32.totalorder %s14, 0
      %p77 = por %p75, %p76
      %p78 = scmp.ne.s32.totalorder %s64, %s65
      %p79 = scmp.eq.s32.totalorder %s15, 1
      %p80 = por %p78, %p79
      %p82 = scmp.ne.s32.totalorder %s65, %s81
      %p83 = scmp.eq.s32.totalorder %s15, 0
      %p84 = por %p82, %p83
      %s86 = sadd.s32 %s85, 1
      %p89 = scmp.eq.s32.totalorder %s9, 1
      %p90 = scmp.ne.s32.totalorder %s85, %s87
      %p91 = scmp.eq.s32.totalorder %s9, 0
      %p92 = por %p90, %p91
      %p93 = scmp.ne.s32.totalorder %s85, %s87
      %p94 = scmp.eq.s32.totalorder %s14, 1
      %p95 = por %p93, %p94
      %p96 = scmp.ne.s32.totalorder %s87, %s88
      %p97 = scmp.eq.s32.totalorder %s14, 0
      %p98 = por %p96, %p97
      %p99 = scmp.ne.s32.totalorder %s87, %s88
      %p100 = scmp.eq.s32.totalorder %s15, 1
      %p101 = por %p99, %p100
      %p103 = scmp.ne.s32.totalorder %s88, %s102
      %p104 = scmp.eq.s32.totalorder %s15, 0
      %p105 = por %p103, %p104
      %p106 = scmp.le.s32.totalorder 1, %s9
      %p107 = scmp.lt.s32.totalorder %s9, 3
      %p108 = pnand %p106, %p107
      %p109 = pneg %p108
      // Predicated region
      $region9: #{fd_loss.1} parent=5 // pred_check
        _
      $region10: #{fd_loss.1} parent=5 // pred_check_branch
        %111 = sbr.rel (%p108) target = $region12
      $region11: #{fd_loss.1} parent=5 // pred_region
        %s112 = ssub.s32 %s9, 1
      $region12: #{fd_loss.1} parent=5 // pred_fallthru
        _
      %p113 = scmp.lt.s32.totalorder %s9, 2
      // Predicated region
      $region13: #{fd_loss.1} parent=5 // pred_check
        %p114 = pneg %p113
      $region14: #{fd_loss.1} parent=5 // pred_check_branch
        %116 = sbr.rel (%p114) target = $region16
      $region15: #{fd_loss.1} parent=5 // pred_region
        // Predicated region
        $region17: #{fd_loss.1} parent=15 // pred_check
          %p117 = pneg %p43
        $region18: #{fd_loss.1} parent=15 // pred_check_branch
          %119 = sbr.rel (%p117) target = $region20
        $region19: #{fd_loss.1} parent=15 // pred_region
          %s120 = smul.u32 2, %s17
          %p121 = scmp.lt.s32.totalorder %s16, 1
          %s122 = scalar_select %p121, %s16, 1
          %p123 = scmp.lt.s32.totalorder %s120, 1
          %s124 = scalar_select %p123, %s120, 1
          %s125 = smul.addr %s122, 2
          %s126 = sadd.s32 %s124, %s125
          %s127 = smul.addr %s126, 4
          %s128 = scalar_lea.vmem %s0, %s127
          %s129 = smul.u32 2, %s17
        $region20: #{fd_loss.1} parent=15 // pred_fallthru
          _
        // Predicated region
        $region21: #{fd_loss.1} parent=15 // pred_check
          %p130 = pneg %p71
        $region22: #{fd_loss.1} parent=15 // pred_check_branch
          %132 = sbr.rel (%p130) target = $region24
        $region23: #{fd_loss.1} parent=15 // pred_region
          %s133 = smul.u32 2, %s17
          %p134 = scmp.lt.s32.totalorder %s16, 1
          %s135 = scalar_select %p134, %s16, 1
          %p136 = scmp.lt.s32.totalorder %s133, 1
          %s137 = scalar_select %p136, %s133, 1
          %s138 = smul.addr %s135, 2
          %s139 = sadd.s32 %s137, %s138
          %s140 = smul.addr %s139, 4
          %s141 = scalar_lea.vmem %s1, %s140
          %s142 = smul.u32 2, %s17
        $region24: #{fd_loss.1} parent=15 // pred_fallthru
          _
      $region16: #{fd_loss.1} parent=5 // pred_fallthru
        _
      %p143 = scmp.le.s32.totalorder 1, %s9
      %p144 = scmp.lt.s32.totalorder %s9, 3
      %p145 = pnand %p143, %p144
      %p146 = pneg %p145
      // Predicated region
      $region25: #{fd_loss.1} parent=5 // pred_check
        _
      $region26: #{fd_loss.1} parent=5 // pred_check_branch
        %148 = sbr.rel (%p145) target = $region28
      $region27: #{fd_loss.1} parent=5 // pred_region
        %s149 = ssub.s32 %s9, 1
        %s150 = smul.u32 2, %s19
        %p151 = scmp.lt.s32.totalorder %s18, 1
        %s152 = scalar_select %p151, %s18, 1
        %p153 = scmp.lt.s32.totalorder %s150, 1
        %s154 = scalar_select %p153, %s150, 1
        %s155 = smul.addr %s152, 2
        %s156 = sadd.s32 %s154, %s155
        %s157 = smul.addr %s156, 4
        %s158 = scalar_lea.vmem %s0, %s157
        %p159 = pneg %p49
        %p160 = pneg %p46
        %s161 = smul.u32 2, %s19
        %p162 = scmp.lt.s32.totalorder %s18, 1
        %s163 = scalar_select %p162, %s18, 1
        %p164 = scmp.lt.s32.totalorder %s161, 1
        %s165 = scalar_select %p164, %s161, 1
        %s166 = smul.addr %s163, 2
        %s167 = sadd.s32 %s165, %s166
        %s168 = smul.addr %s167, 4
        %s169 = scalar_lea.vmem %s1, %s168
        %p170 = pneg %p77
        %p171 = pneg %p74
        %p172 = pneg %p98
        %p173 = pneg %p95
        %s174 = smul.u32 2, %s19
        %p175 = scmp.lt.s32.totalorder %s18, 1
        %s176 = scalar_select %p175, %s18, 1
        %p177 = scmp.lt.s32.totalorder %s174, 1
        %s178 = scalar_select %p177, %s174, 1
        %s179 = smul.addr %s176, 2
        %s180 = sadd.s32 %s178, %s179
        %s181 = smul.addr %s180, 4
        %s182 = scalar_lea.vmem %s0, %s181
        %s183 = smul.u32 2, %s19
        %s184 = smul.u32 2, %s19
        %p185 = scmp.lt.s32.totalorder %s18, 1
        %s186 = scalar_select %p185, %s18, 1
        %p187 = scmp.lt.s32.totalorder %s184, 1
        %s188 = scalar_select %p187, %s184, 1
        %s189 = smul.addr %s186, 2
        %s190 = sadd.s32 %s188, %s189
        %s191 = smul.addr %s190, 4
        %s192 = scalar_lea.vmem %s1, %s191
        %s193 = smul.u32 2, %s19
        %p194 = scmp.eq.s32.totalorder %s18, 0
        %p195 = scmp.eq.s32.totalorder %s19, 0
        %p196 = pnand %p194, %p195
        %p197 = pneg %p196
        // Predicated region
        $region29: #{fd_loss.1} parent=27 // pred_check
          _
        $region30: #{fd_loss.1} parent=27 // pred_check_branch
          %199 = sbr.rel (%p196) target = $region32
        $region31: #{fd_loss.1} parent=27 // pred_region
          %200 = vst [vmem:[#allocation2] sm:$0xff] 0.0
          %v201 = vlaneseq
          %vm202 = vcmp.ge.s32.totalorder %v201, 0
          %vm203 = vcmp.lt.s32.totalorder %v201, 256
          %vm204 = vmand %vm202, %vm203
          %205 = vst.msk [vmem:[#allocation3] sm:$0x3] %vm204, 0.0
          %206 = vst.msk [vmem:[#allocation4] sm:$0x3] %vm204, 0.0
          %207 = vst.msk [vmem:[#allocation5] sm:$0x3] %vm204, 0.0
        $region32: #{fd_loss.1} parent=27 // pred_fallthru
          _
        %v208 = vld [vmem:[%s182] sm:$0xff]
        %v209 = vld [vmem:[%s192] sm:$0xff]
        %v210 = vsub.f32 1.0, %v208
        %v211 = vlog2.pop %v208
        %v212 = vmul.f32 %v211, 0.6931472
        %v213 = vlog2.pop %v210
        %v214 = vmul.f32 %v213, 0.6931472
        %v215 = vmul.f32 %v210, -0.25
        %v216 = vmul.f32 %v215, %v210
        %v217 = vmul.f32 %v216, %v209
        %v218 = vmul.f32 %v217, %v212
        %v219 = vmul.f32 %v208, 0.75
        %v220 = vmul.f32 %v219, %v208
        %v221 = vsub.f32 1.0, %v209
        %v222 = vmul.f32 %v220, %v221
        %v223 = vmul.f32 %v222, %v214
        %v224 = vsub.f32 %v218, %v223
        %v225 = vld [vmem:[#allocation2] sm:$0xff]
        %v226 = vadd.f32 %v225, %v224
        %227 = vst [vmem:[#allocation2] sm:$0xff] %v226
        %v228 = vld [vmem:[#allocation3] sm:$0x3]
        %v229 = vmul.f32 %v209, %v208
        %v231 = vrot.slane %v229, 3
        %vm232 = vcmask 1040384
        %v233 = vsel %vm232, %v229, %v231
        %v235 = vadd.f32 %v228, %v233
        %v236 = vlaneseq
        %vm237 = vcmp.ge.s32.totalorder %v236, 0
        %vm238 = vcmp.lt.s32.totalorder %v236, 256
        %vm239 = vmand %vm237, %vm238
        %240 = vst.msk [vmem:[#allocation3] sm:$0x3] %vm239, %v235
        %v241 = vld [vmem:[#allocation4] sm:$0x3]
        %v243 = vrot.slane %v209, 3
        %v244 = vsel %vm232, %v209, %v243
        %v246 = vadd.f32 %v241, %v244
        %247 = vst.msk [vmem:[#allocation4] sm:$0x3] %vm239, %v246
        %v248 = vld [vmem:[#allocation5] sm:$0x3]
        %v250 = vrot.slane %v208, 3
        %v251 = vsel %vm232, %v208, %v250
        %v253 = vadd.f32 %v248, %v251
        %254 = vst.msk [vmem:[#allocation5] sm:$0x3] %vm239, %v253
        %p255 = scmp.eq.s32.totalorder %s18, 1
        %p256 = pnand %p255, %p195
        %p257 = pneg %p256
        // Predicated region
        $region33: #{fd_loss.1} parent=27 // pred_check
          _
        $region34: #{fd_loss.1} parent=27 // pred_check_branch
          %259 = sbr.rel (%p256) target = $region36
        $region35: #{fd_loss.1} parent=27 // pred_region
          %v260 = vld [vmem:[#allocation2] sm:$0xff]
          %262 = vst [vmem:[#allocation1] ss:$2 sm:$0xff] %v260
          %v263 = vld.sshfl [vmem:[#allocation1] sm:$0xff pattern:$0x75316420]
          %v264 = vld.sshfl [vmem:[#allocation1 + $0x8] sm:$0xff pattern:$0x75316420]
          %vm267 = vcmask 1043456
          %v268 = vsel %vm267, %v263, 0.0
          %v269 = vsel %vm267, %v264, 0.0
          %v270 = vadd.f32 %v268, %v269
          %271 = vadd.xlane.f32.xlu0 %v270
          %v272 = vpop.xlane.xlu0 %271
          %v273 = vrot.slane %v272, 4
          %v274 = vadd.f32 %v272, %v273
          %v275 = vrot.slane %v274, 2
          %v276 = vadd.f32 %v274, %v275
          %v277 = vrot.slane %v276, 1
          %v278 = vadd.f32 %v276, %v277
          %s279 = vtos %v278
          %s280 = scalar_lea.smem [#allocation6], 0
          %281 = sst [smem:[%s280]] %s279
          %v282 = vld [vmem:[#allocation3] sm:$0x3]
          %v284 = vperm.slane %v282, 0
          %v285 = vperm.slane %v282, 1
          %v288 = vsel %vm232, %v284, 0.0
          %v289 = vsel %vm232, %v285, 0.0
          %v290 = vadd.f32 %v288, %v289
          %291 = vadd.xlane.f32.xlu0 %v290
          %v292 = vpop.xlane.xlu0 %291
          %v293 = vrot.slane %v292, 4
          %v294 = vadd.f32 %v292, %v293
          %v295 = vrot.slane %v294, 2
          %v296 = vadd.f32 %v294, %v295
          %v297 = vrot.slane %v296, 1
          %v298 = vadd.f32 %v296, %v297
          %s299 = vtos %v298
          %s300 = scalar_lea.smem [#allocation6], 1
          %301 = sst [smem:[%s300]] %s299
          %v302 = vld [vmem:[#allocation4] sm:$0x3]
          %v304 = vperm.slane %v302, 0
          %v305 = vperm.slane %v302, 1
          %v308 = vsel %vm232, %v304, 0.0
          %v309 = vsel %vm232, %v305, 0.0
          %v310 = vadd.f32 %v308, %v309
          %311 = vadd.xlane.f32.xlu0 %v310
          %v312 = vpop.xlane.xlu0 %311
          %v313 = vrot.slane %v312, 4
          %v314 = vadd.f32 %v312, %v313
          %v315 = vrot.slane %v314, 2
          %v316 = vadd.f32 %v314, %v315
          %v317 = vrot.slane %v316, 1
          %v318 = vadd.f32 %v316, %v317
          %s319 = vtos %v318
          %s320 = scalar_lea.smem [#allocation6], 2
          %321 = sst [smem:[%s320]] %s319
          %v322 = vld [vmem:[#allocation5] sm:$0x3]
          %v324 = vperm.slane %v322, 0
          %v325 = vperm.slane %v322, 1
          %v328 = vsel %vm232, %v324, 0.0
          %v329 = vsel %vm232, %v325, 0.0
          %v330 = vadd.f32 %v328, %v329
          %331 = vadd.xlane.f32.xlu0 %v330
          %v332 = vpop.xlane.xlu0 %331
          %v333 = vrot.slane %v332, 4
          %v334 = vadd.f32 %v332, %v333
          %v335 = vrot.slane %v334, 2
          %v336 = vadd.f32 %v334, %v335
          %v337 = vrot.slane %v336, 1
          %v338 = vadd.f32 %v336, %v337
          %s339 = vtos %v338
          %s340 = scalar_lea.smem [#allocation6], 3
          %341 = sst [smem:[%s340]] %s339
        $region36: #{fd_loss.1} parent=27 // pred_fallthru
          _
        // Predicated region
        $region37: #{fd_loss.1} parent=27 // pred_check
          %p342 = pneg %p95
        $region38: #{fd_loss.1} parent=27 // pred_check_branch
          %344 = sbr.rel (%p342) target = $region40
        $region39: #{fd_loss.1} parent=27 // pred_region
          %346 = vsyncadd [#allocation7], 0
          %s348 = sshll.u32 %s2, 4
          %s349 = int_to_ptr.vmem [resolvable:$true] %s348
          %351 = dma.smem_to_vmem [#allocation6], 16, %s349, [#allocation7]
        $region40: #{fd_loss.1} parent=27 // pred_fallthru
          _
        // Predicated region
        $region41: #{fd_loss.1} parent=27 // pred_check
          %p352 = pneg %p95
        $region42: #{fd_loss.1} parent=27 // pred_check_branch
          %354 = sbr.rel (%p352) target = $region44
        $region43: #{fd_loss.1} parent=27 // pred_region
          %356 = dma.done [#allocation7], 16
        $region44: #{fd_loss.1} parent=27 // pred_fallthru
          _
        %357 = sfence
      $region28: #{fd_loss.1} parent=5 // pred_fallthru
        _
      %p358 = scmp.le.s32.totalorder 2, %s9
      // Predicated region
      $region45: #{fd_loss.1} parent=5 // pred_check
        %p359 = pneg %p358
      $region46: #{fd_loss.1} parent=5 // pred_check_branch
        %361 = sbr.rel (%p359) target = $region48
      $region47: #{fd_loss.1} parent=5 // pred_region
        %s362 = ssub.s32 %s9, 2
      $region48: #{fd_loss.1} parent=5 // pred_fallthru
        _
    $region6: #{fd_loss.1} parent=1 // loop_footer
      %s13 = sadd.s32 1, %s9
    $region7: #{fd_loss.1} parent=1 // loop_footer_branch
      %8 = sbr.rel target = $region3
    $region8: #{fd_loss.1} parent=1 // loop_exit
      _
    %363 = vsyncpa [#allocation7], 1
    %s364 = scalar_lea.sflag [#allocation7], 1
    %365 = vsyncpa %s364, 1

</llo_original>
